<compile_context>
chip_gen: v7x
topology: tpu7x:2x2x1
jax: 0.10.0
libtpu: 0.0.40
codegen_flags: <defaults>
</compile_context>

<pallas_src>
import functools

import jax
import jax.numpy as jnp
import numpy as np
from jax import lax
from jax.experimental import pallas as pl
from jax.experimental.pallas import tpu as pltpu


# ----------------------------------------------------------------------------
# In-kernel building blocks
# ----------------------------------------------------------------------------
def _causal_conv(x, w, *, K, dilation, cin, relu):
    """Causal dilated Conv1d on a VMEM-resident activation value.

    x : (cin, T) f32 activation
    w : (cout, K*cin + 1) fused weight matrix; column k*cin + ci is the weight
        of tap k / input channel ci, the last column is the bias.
    Returns (cout, T) f32.
    """
    T = x.shape[-1]
    cout = w.shape[0]
    pad = (K - 1) * dilation

    # Causal left-pad, done in-register (equivalent to PyTorch pad + Chomp1d).
    xp = jnp.concatenate([jnp.zeros((cin, pad), jnp.float32), x], axis=-1) if pad else x
    taps = [xp[:, k * dilation: k * dilation + T] for k in range(K)]  # K x (cin, T)

    if cin < 8:
        # Tiny contraction dim (cin=1 first layer / 1x1 downsample): an MXU
        # matmul would be padded to the full systolic K -> <1% utilization.
        # Do broadcast MACs on the VPU instead; add the bias column directly.
        acc = jnp.zeros((cout, T), jnp.float32)
        for k in range(K):
            for ci in range(cin):
                col = k * cin + ci
                acc = acc + w[:, col:col + 1] * taps[k][ci:ci + 1, :]
        acc = acc + w[:, K * cin:K * cin + 1]
    else:
        # One MXU push: stack the K dilated views plus a ones-row (folds the
        # bias into the matmul) -> contraction dim K*cin + 1.
        x_stack = jnp.concatenate(taps + [jnp.ones((1, T), jnp.float32)], axis=0)
        acc = jnp.dot(w, x_stack, preferred_element_type=jnp.float32)

    return jnp.maximum(acc, 0.0) if relu else acc


def _tcn_fused_kernel(x_ref, *rest, configs):
    """Whole TCN (all residual blocks) fused into a single kernel body.

    x_ref   : (cin0, T) input tile for one batch element
    rest    : (*weight_refs, o_ref), weights ordered per `configs`
    configs : static tuple of (K, dilation, cin, cout, has_downsample)
    """
    w_refs = rest[:-1]
    o_ref = rest[-1]

    x = x_ref[...].astype(jnp.float32)           # stays VMEM/vreg-resident
    wi = 0
    for (K, d, cin, cout, has_ds) in configs:    # static unroll over layers
        w1 = w_refs[wi][...]
        w2 = w_refs[wi + 1][...]
        wi += 2
        out = _causal_conv(x, w1, K=K, dilation=d, cin=cin, relu=True)
        out = _causal_conv(out, w2, K=K, dilation=d, cin=cout, relu=True)
        if has_ds:                               # 1x1 conv on the residual path
            wd = w_refs[wi][...]
            wi += 1
            res = _causal_conv(x, wd, K=1, dilation=1, cin=cin, relu=False)
        else:
            res = x
        x = jnp.maximum(out + res, 0.0)          # residual add + ReLU

    o_ref[...] = x.astype(o_ref.dtype)


# ----------------------------------------------------------------------------
# Wrapper: one pallas_call for the whole network
# ----------------------------------------------------------------------------
def tcn_forward(x, layers):
    """Fused Pallas forward pass. x: (B, cin0, T) f32 -> (B, cout_last, T)."""
    B, cin0, T = x.shape
    configs, weights = [], []
    for lyr in layers:
        configs.append((lyr["K"], lyr["dilation"], lyr["cin"], lyr["cout"],
                        lyr["wd"] is not None))
        weights.append(lyr["w1"])
        weights.append(lyr["w2"])
        if lyr["wd"] is not None:
            weights.append(lyr["wd"])
    cout_last = layers[-1]["cout"]

    kern = functools.partial(_tcn_fused_kernel, configs=tuple(configs))
    # Constant index_map -> each weight is DMA'd once and stays VMEM-resident.
    w_specs = [pl.BlockSpec(w.shape, lambda b: (0, 0)) for w in weights]

    return pl.pallas_call(
        kern,
        out_shape=jax.ShapeDtypeStruct((B, cout_last, T), x.dtype),
        grid_spec=pltpu.PrefetchScalarGridSpec(
            num_scalar_prefetch=0,
            grid=(B,),  # parallel batch axis -> both TensorCores on v7x
            in_specs=[pl.BlockSpec((None, cin0, T), lambda b: (b, 0, 0))] + w_specs,
            out_specs=pl.BlockSpec((None, cout_last, T), lambda b: (b, 0, 0)),
        ),
        compiler_params=pltpu.CompilerParams(dimension_semantics=("parallel",)),
    )(x, *weights)


# ----------------------------------------------------------------------------
# Parameters (fused layout) — mirrors the TCN's weight.normal_(0, 0.01) init
# ----------------------------------------------------------------------------
def init_tcn_params(key, num_inputs, num_channels, kernel_size):
    layers = []
    K = kernel_size
    for i, cout in enumerate(num_channels):
        cin = num_inputs if i == 0 else num_channels[i - 1]
        key, k1, k2, k3, k4, k5, k6 = jax.random.split(key, 7)
        w1 = 0.01 * jax.random.normal(k1, (cout, K * cin), jnp.float32)
        b1 = 0.01 * jax.random.normal(k2, (cout, 1), jnp.float32)
        w2 = 0.01 * jax.random.normal(k3, (cout, K * cout), jnp.float32)
        b2 = 0.01 * jax.random.normal(k4, (cout, 1), jnp.float32)
        layer = {
            "dilation": 2 ** i, "K": K, "cin": cin, "cout": cout,
            "w1": jnp.concatenate([w1, b1], axis=1),   # (cout, K*cin + 1)
            "w2": jnp.concatenate([w2, b2], axis=1),   # (cout, K*cout + 1)
            "wd": None,
        }
        if cin != cout:  # 1x1 downsample conv on the residual path
            wd = 0.01 * jax.random.normal(k5, (cout, cin), jnp.float32)
            bd = 0.01 * jax.random.normal(k6, (cout, 1), jnp.float32)
            layer["wd"] = jnp.concatenate([wd, bd], axis=1)  # (cout, cin + 1)
        layers.append(layer)
    # TODO(synk): weight_norm reparametrization omitted — numerically identical at
    # deterministic init; trained PyTorch weights must be merged (w = g*v/||v||) on
    # the host before being passed in. Dropout=0.0 per the spec, so no dropout path.
    return layers


# ----------------------------------------------------------------------------
# Pure-JAX reference (correctness check)
# ----------------------------------------------------------------------------
def _ref_conv(x, w_mat, *, K, cin, dilation, relu):
    cout = w_mat.shape[0]
    w = w_mat[:, :K * cin].reshape(cout, K, cin).transpose(0, 2, 1)  # (cout, cin, K)
    b = w_mat[:, K * cin]
    y = lax.conv_general_dilated(
        x, w, window_strides=(1,), padding=[((K - 1) * dilation, 0)],
        rhs_dilation=(dilation,), dimension_numbers=("NCH", "OIH", "NCH"))
    y = y + b[None, :, None]
    return jnp.maximum(y, 0.0) if relu else y


def ref_forward(x, layers):
    for lyr in layers:
        K, d, cin, cout = lyr["K"], lyr["dilation"], lyr["cin"], lyr["cout"]
        out = _ref_conv(x, lyr["w1"], K=K, cin=cin, dilation=d, relu=True)
        out = _ref_conv(out, lyr["w2"], K=K, cin=cout, dilation=d, relu=True)
        res = x if lyr["wd"] is None else _ref_conv(
            x, lyr["wd"], K=1, cin=cin, dilation=1, relu=False)
        x = jnp.maximum(out + res, 0.0)
    return x


# ----------------------------------------------------------------------------
if __name__ == "__main__":
    # Small, module-consistent shapes: TCN input is (batch, num_inputs=1, seq).
    B, T = 2, 128
    tconv_num_channels = [16, 16, 8]
    tconv_kernel_size = 3

    key = jax.random.PRNGKey(0)
    kx, kp = jax.random.split(key)
    net_in = jax.random.normal(kx, (B, 1, T), jnp.float32)

    layers = init_tcn_params(kp, num_inputs=1,
                             num_channels=tconv_num_channels,
                             kernel_size=tconv_kernel_size)

    out = tcn_forward(net_in, layers)
    out = jax.block_until_ready(out)

    ref = ref_forward(net_in, layers)
    assert out.shape == (B, tconv_num_channels[-1], T)
    np.testing.assert_allclose(np.asarray(out), np.asarray(ref), rtol=1e-5, atol=1e-5)

    print("KERNEL_OK")
</pallas_src>

<mosaic_0001>
module attributes {stable_mosaic.version = 11 : i64} {
  func.func @_tcn_fused_kernel(%arg0: i32, %arg1: memref<1x1x128xf32, #tpu.memory_space<vmem>>, %arg2: memref<16x4xf32, #tpu.memory_space<vmem>>, %arg3: memref<16x49xf32, #tpu.memory_space<vmem>>, %arg4: memref<16x2xf32, #tpu.memory_space<vmem>>, %arg5: memref<16x49xf32, #tpu.memory_space<vmem>>, %arg6: memref<16x49xf32, #tpu.memory_space<vmem>>, %arg7: memref<8x49xf32, #tpu.memory_space<vmem>>, %arg8: memref<8x25xf32, #tpu.memory_space<vmem>>, %arg9: memref<8x17xf32, #tpu.memory_space<vmem>>, %arg10: memref<1x8x128xf32, #tpu.memory_space<vmem>>) attributes {dimension_semantics = [#tpu.dimension_semantics<parallel>], iteration_bounds = array<i64: 2>, scalar_prefetch = 0 : i64, scratch_operands = 0 : i64, tpu.core_type = #tpu.core_type<tc>, window_params = [{transform_indices = @transform_0, window_bounds = array<i64: 1, 1, 128>}, {pipeline_mode = #tpu.pipeline_mode<synchronous>, transform_indices = @transform_1, window_bounds = array<i64: 16, 4>}, {pipeline_mode = #tpu.pipeline_mode<synchronous>, transform_indices = @transform_2, window_bounds = array<i64: 16, 49>}, {pipeline_mode = #tpu.pipeline_mode<synchronous>, transform_indices = @transform_3, window_bounds = array<i64: 16, 2>}, {pipeline_mode = #tpu.pipeline_mode<synchronous>, transform_indices = @transform_4, window_bounds = array<i64: 16, 49>}, {pipeline_mode = #tpu.pipeline_mode<synchronous>, transform_indices = @transform_5, window_bounds = array<i64: 16, 49>}, {pipeline_mode = #tpu.pipeline_mode<synchronous>, transform_indices = @transform_6, window_bounds = array<i64: 8, 49>}, {pipeline_mode = #tpu.pipeline_mode<synchronous>, transform_indices = @transform_7, window_bounds = array<i64: 8, 25>}, {pipeline_mode = #tpu.pipeline_mode<synchronous>, transform_indices = @transform_8, window_bounds = array<i64: 8, 17>}, {transform_indices = @transform_9, window_bounds = array<i64: 1, 8, 128>}]} {
    %c0 = arith.constant 0 : index
    %c0_0 = arith.constant 0 : index
    %c0_1 = arith.constant 0 : index
    %0 = vector.load %arg1[%c0, %c0_0, %c0_1] : memref<1x1x128xf32, #tpu.memory_space<vmem>>, vector<1x1x128xf32>
    %1 = vector.shape_cast %0 : vector<1x1x128xf32> to vector<1x128xf32>
    %c0_2 = arith.constant 0 : index
    %c0_3 = arith.constant 0 : index
    %2 = vector.load %arg2[%c0_2, %c0_3] : memref<16x4xf32, #tpu.memory_space<vmem>>, vector<16x4xf32>
    %c0_4 = arith.constant 0 : index
    %c0_5 = arith.constant 0 : index
    %3 = vector.load %arg3[%c0_4, %c0_5] : memref<16x49xf32, #tpu.memory_space<vmem>>, vector<16x49xf32>
    %cst = arith.constant 0.000000e+00 : f32
    %4 = vector.broadcast %cst : f32 to vector<1x2xf32>
    %5 = tpu.concatenate %4, %1 in 1 : vector<1x2xf32>, vector<1x128xf32> -> vector<1x130xf32>
    %6 = vector.extract_strided_slice %5 {offsets = [0, 0], sizes = [1, 128], strides = [1, 1]} : vector<1x130xf32> to vector<1x128xf32>
    %7 = vector.extract_strided_slice %5 {offsets = [0, 1], sizes = [1, 128], strides = [1, 1]} : vector<1x130xf32> to vector<1x128xf32>
    %8 = vector.extract_strided_slice %5 {offsets = [0, 2], sizes = [1, 128], strides = [1, 1]} : vector<1x130xf32> to vector<1x128xf32>
    %cst_6 = arith.constant 0.000000e+00 : f32
    %9 = vector.broadcast %cst_6 : f32 to vector<16x128xf32>
    %10 = vector.extract_strided_slice %2 {offsets = [0, 0], sizes = [16, 1], strides = [1, 1]} : vector<16x4xf32> to vector<16x1xf32>
    %11 = vector.broadcast %10 : vector<16x1xf32> to vector<16x128xf32>
    %12 = vector.broadcast %6 : vector<1x128xf32> to vector<16x128xf32>
    %13 = arith.mulf %11, %12 : vector<16x128xf32>
    %14 = arith.addf %9, %13 : vector<16x128xf32>
    %15 = vector.extract_strided_slice %2 {offsets = [0, 1], sizes = [16, 1], strides = [1, 1]} : vector<16x4xf32> to vector<16x1xf32>
    %16 = vector.broadcast %15 : vector<16x1xf32> to vector<16x128xf32>
    %17 = vector.broadcast %7 : vector<1x128xf32> to vector<16x128xf32>
    %18 = arith.mulf %16, %17 : vector<16x128xf32>
    %19 = arith.addf %14, %18 : vector<16x128xf32>
    %20 = vector.extract_strided_slice %2 {offsets = [0, 2], sizes = [16, 1], strides = [1, 1]} : vector<16x4xf32> to vector<16x1xf32>
    %21 = vector.broadcast %20 : vector<16x1xf32> to vector<16x128xf32>
    %22 = vector.broadcast %8 : vector<1x128xf32> to vector<16x128xf32>
    %23 = arith.mulf %21, %22 : vector<16x128xf32>
    %24 = arith.addf %19, %23 : vector<16x128xf32>
    %25 = vector.extract_strided_slice %2 {offsets = [0, 3], sizes = [16, 1], strides = [1, 1]} : vector<16x4xf32> to vector<16x1xf32>
    %26 = vector.broadcast %25 : vector<16x1xf32> to vector<16x128xf32>
    %27 = arith.addf %24, %26 : vector<16x128xf32>
    %cst_7 = arith.constant 0.000000e+00 : f32
    %28 = vector.broadcast %cst_7 : f32 to vector<16x128xf32>
    %29 = arith.maximumf %27, %28 : vector<16x128xf32>
    %cst_8 = arith.constant 0.000000e+00 : f32
    %30 = vector.broadcast %cst_8 : f32 to vector<16x2xf32>
    %31 = tpu.concatenate %30, %29 in 1 : vector<16x2xf32>, vector<16x128xf32> -> vector<16x130xf32>
    %32 = vector.extract_strided_slice %31 {offsets = [0, 0], sizes = [16, 128], strides = [1, 1]} : vector<16x130xf32> to vector<16x128xf32>
    %33 = vector.extract_strided_slice %31 {offsets = [0, 1], sizes = [16, 128], strides = [1, 1]} : vector<16x130xf32> to vector<16x128xf32>
    %34 = vector.extract_strided_slice %31 {offsets = [0, 2], sizes = [16, 128], strides = [1, 1]} : vector<16x130xf32> to vector<16x128xf32>
    %cst_9 = arith.constant 1.000000e+00 : f32
    %35 = vector.broadcast %cst_9 : f32 to vector<1x128xf32>
    %36 = tpu.concatenate %32, %33, %34, %35 in 0 : vector<16x128xf32>, vector<16x128xf32>, vector<16x128xf32>, vector<1x128xf32> -> vector<49x128xf32>
    %cst_10 = arith.constant dense<0.000000e+00> : vector<16x128xf32>
    %37 = tpu.matmul %3, %36, %cst_10 {dimension_numbers = #tpu.dot_dimension_numbers<[1], [0], [0], [1], [0, 0, 1, 1], [], []>} : vector<16x49xf32>, vector<49x128xf32>, vector<16x128xf32> -> vector<16x128xf32>
    %cst_11 = arith.constant 0.000000e+00 : f32
    %38 = vector.broadcast %cst_11 : f32 to vector<16x128xf32>
    %39 = arith.maximumf %37, %38 : vector<16x128xf32>
    %c0_12 = arith.constant 0 : index
    %c0_13 = arith.constant 0 : index
    %40 = vector.load %arg4[%c0_12, %c0_13] : memref<16x2xf32, #tpu.memory_space<vmem>>, vector<16x2xf32>
    %cst_14 = arith.constant 0.000000e+00 : f32
    %41 = vector.broadcast %cst_14 : f32 to vector<16x128xf32>
    %42 = vector.extract_strided_slice %40 {offsets = [0, 0], sizes = [16, 1], strides = [1, 1]} : vector<16x2xf32> to vector<16x1xf32>
    %43 = vector.broadcast %42 : vector<16x1xf32> to vector<16x128xf32>
    %44 = vector.broadcast %1 : vector<1x128xf32> to vector<16x128xf32>
    %45 = arith.mulf %43, %44 : vector<16x128xf32>
    %46 = arith.addf %41, %45 : vector<16x128xf32>
    %47 = vector.extract_strided_slice %40 {offsets = [0, 1], sizes = [16, 1], strides = [1, 1]} : vector<16x2xf32> to vector<16x1xf32>
    %48 = vector.broadcast %47 : vector<16x1xf32> to vector<16x128xf32>
    %49 = arith.addf %46, %48 : vector<16x128xf32>
    %50 = arith.addf %39, %49 : vector<16x128xf32>
    %cst_15 = arith.constant 0.000000e+00 : f32
    %51 = vector.broadcast %cst_15 : f32 to vector<16x128xf32>
    %52 = arith.maximumf %50, %51 : vector<16x128xf32>
    %c0_16 = arith.constant 0 : index
    %c0_17 = arith.constant 0 : index
    %53 = vector.load %arg5[%c0_16, %c0_17] : memref<16x49xf32, #tpu.memory_space<vmem>>, vector<16x49xf32>
    %c0_18 = arith.constant 0 : index
    %c0_19 = arith.constant 0 : index
    %54 = vector.load %arg6[%c0_18, %c0_19] : memref<16x49xf32, #tpu.memory_space<vmem>>, vector<16x49xf32>
    %cst_20 = arith.constant 0.000000e+00 : f32
    %55 = vector.broadcast %cst_20 : f32 to vector<16x4xf32>
    %56 = tpu.concatenate %55, %52 in 1 : vector<16x4xf32>, vector<16x128xf32> -> vector<16x132xf32>
    %57 = vector.extract_strided_slice %56 {offsets = [0, 0], sizes = [16, 128], strides = [1, 1]} : vector<16x132xf32> to vector<16x128xf32>
    %58 = vector.extract_strided_slice %56 {offsets = [0, 2], sizes = [16, 128], strides = [1, 1]} : vector<16x132xf32> to vector<16x128xf32>
    %59 = vector.extract_strided_slice %56 {offsets = [0, 4], sizes = [16, 128], strides = [1, 1]} : vector<16x132xf32> to vector<16x128xf32>
    %cst_21 = arith.constant 1.000000e+00 : f32
    %60 = vector.broadcast %cst_21 : f32 to vector<1x128xf32>
    %61 = tpu.concatenate %57, %58, %59, %60 in 0 : vector<16x128xf32>, vector<16x128xf32>, vector<16x128xf32>, vector<1x128xf32> -> vector<49x128xf32>
    %cst_22 = arith.constant dense<0.000000e+00> : vector<16x128xf32>
    %62 = tpu.matmul %53, %61, %cst_22 {dimension_numbers = #tpu.dot_dimension_numbers<[1], [0], [0], [1], [0, 0, 1, 1], [], []>} : vector<16x49xf32>, vector<49x128xf32>, vector<16x128xf32> -> vector<16x128xf32>
    %cst_23 = arith.constant 0.000000e+00 : f32
    %63 = vector.broadcast %cst_23 : f32 to vector<16x128xf32>
    %64 = arith.maximumf %62, %63 : vector<16x128xf32>
    %cst_24 = arith.constant 0.000000e+00 : f32
    %65 = vector.broadcast %cst_24 : f32 to vector<16x4xf32>
    %66 = tpu.concatenate %65, %64 in 1 : vector<16x4xf32>, vector<16x128xf32> -> vector<16x132xf32>
    %67 = vector.extract_strided_slice %66 {offsets = [0, 0], sizes = [16, 128], strides = [1, 1]} : vector<16x132xf32> to vector<16x128xf32>
    %68 = vector.extract_strided_slice %66 {offsets = [0, 2], sizes = [16, 128], strides = [1, 1]} : vector<16x132xf32> to vector<16x128xf32>
    %69 = vector.extract_strided_slice %66 {offsets = [0, 4], sizes = [16, 128], strides = [1, 1]} : vector<16x132xf32> to vector<16x128xf32>
    %cst_25 = arith.constant 1.000000e+00 : f32
    %70 = vector.broadcast %cst_25 : f32 to vector<1x128xf32>
    %71 = tpu.concatenate %67, %68, %69, %70 in 0 : vector<16x128xf32>, vector<16x128xf32>, vector<16x128xf32>, vector<1x128xf32> -> vector<49x128xf32>
    %cst_26 = arith.constant dense<0.000000e+00> : vector<16x128xf32>
    %72 = tpu.matmul %54, %71, %cst_26 {dimension_numbers = #tpu.dot_dimension_numbers<[1], [0], [0], [1], [0, 0, 1, 1], [], []>} : vector<16x49xf32>, vector<49x128xf32>, vector<16x128xf32> -> vector<16x128xf32>
    %cst_27 = arith.constant 0.000000e+00 : f32
    %73 = vector.broadcast %cst_27 : f32 to vector<16x128xf32>
    %74 = arith.maximumf %72, %73 : vector<16x128xf32>
    %75 = arith.addf %74, %52 : vector<16x128xf32>
    %cst_28 = arith.constant 0.000000e+00 : f32
    %76 = vector.broadcast %cst_28 : f32 to vector<16x128xf32>
    %77 = arith.maximumf %75, %76 : vector<16x128xf32>
    %c0_29 = arith.constant 0 : index
    %c0_30 = arith.constant 0 : index
    %78 = vector.load %arg7[%c0_29, %c0_30] : memref<8x49xf32, #tpu.memory_space<vmem>>, vector<8x49xf32>
    %c0_31 = arith.constant 0 : index
    %c0_32 = arith.constant 0 : index
    %79 = vector.load %arg8[%c0_31, %c0_32] : memref<8x25xf32, #tpu.memory_space<vmem>>, vector<8x25xf32>
    %cst_33 = arith.constant 0.000000e+00 : f32
    %80 = vector.broadcast %cst_33 : f32 to vector<16x8xf32>
    %81 = tpu.concatenate %80, %77 in 1 : vector<16x8xf32>, vector<16x128xf32> -> vector<16x136xf32>
    %82 = vector.extract_strided_slice %81 {offsets = [0, 0], sizes = [16, 128], strides = [1, 1]} : vector<16x136xf32> to vector<16x128xf32>
    %83 = vector.extract_strided_slice %81 {offsets = [0, 4], sizes = [16, 128], strides = [1, 1]} : vector<16x136xf32> to vector<16x128xf32>
    %84 = vector.extract_strided_slice %81 {offsets = [0, 8], sizes = [16, 128], strides = [1, 1]} : vector<16x136xf32> to vector<16x128xf32>
    %cst_34 = arith.constant 1.000000e+00 : f32
    %85 = vector.broadcast %cst_34 : f32 to vector<1x128xf32>
    %86 = tpu.concatenate %82, %83, %84, %85 in 0 : vector<16x128xf32>, vector<16x128xf32>, vector<16x128xf32>, vector<1x128xf32> -> vector<49x128xf32>
    %cst_35 = arith.constant dense<0.000000e+00> : vector<8x128xf32>
    %87 = tpu.matmul %78, %86, %cst_35 {dimension_numbers = #tpu.dot_dimension_numbers<[1], [0], [0], [1], [0, 0, 1, 1], [], []>} : vector<8x49xf32>, vector<49x128xf32>, vector<8x128xf32> -> vector<8x128xf32>
    %cst_36 = arith.constant 0.000000e+00 : f32
    %88 = vector.broadcast %cst_36 : f32 to vector<8x128xf32>
    %89 = arith.maximumf %87, %88 : vector<8x128xf32>
    %cst_37 = arith.constant 0.000000e+00 : f32
    %90 = vector.broadcast %cst_37 : f32 to vector<8x8xf32>
    %91 = tpu.concatenate %90, %89 in 1 : vector<8x8xf32>, vector<8x128xf32> -> vector<8x136xf32>
    %92 = vector.extract_strided_slice %91 {offsets = [0, 0], sizes = [8, 128], strides = [1, 1]} : vector<8x136xf32> to vector<8x128xf32>
    %93 = vector.extract_strided_slice %91 {offsets = [0, 4], sizes = [8, 128], strides = [1, 1]} : vector<8x136xf32> to vector<8x128xf32>
    %94 = vector.extract_strided_slice %91 {offsets = [0, 8], sizes = [8, 128], strides = [1, 1]} : vector<8x136xf32> to vector<8x128xf32>
    %cst_38 = arith.constant 1.000000e+00 : f32
    %95 = vector.broadcast %cst_38 : f32 to vector<1x128xf32>
    %96 = tpu.concatenate %92, %93, %94, %95 in 0 : vector<8x128xf32>, vector<8x128xf32>, vector<8x128xf32>, vector<1x128xf32> -> vector<25x128xf32>
    %cst_39 = arith.constant dense<0.000000e+00> : vector<8x128xf32>
    %97 = tpu.matmul %79, %96, %cst_39 {dimension_numbers = #tpu.dot_dimension_numbers<[1], [0], [0], [1], [0, 0, 1, 1], [], []>} : vector<8x25xf32>, vector<25x128xf32>, vector<8x128xf32> -> vector<8x128xf32>
    %cst_40 = arith.constant 0.000000e+00 : f32
    %98 = vector.broadcast %cst_40 : f32 to vector<8x128xf32>
    %99 = arith.maximumf %97, %98 : vector<8x128xf32>
    %c0_41 = arith.constant 0 : index
    %c0_42 = arith.constant 0 : index
    %100 = vector.load %arg9[%c0_41, %c0_42] : memref<8x17xf32, #tpu.memory_space<vmem>>, vector<8x17xf32>
    %cst_43 = arith.constant 1.000000e+00 : f32
    %101 = vector.broadcast %cst_43 : f32 to vector<1x128xf32>
    %102 = tpu.concatenate %77, %101 in 0 : vector<16x128xf32>, vector<1x128xf32> -> vector<17x128xf32>
    %cst_44 = arith.constant dense<0.000000e+00> : vector<8x128xf32>
    %103 = tpu.matmul %100, %102, %cst_44 {dimension_numbers = #tpu.dot_dimension_numbers<[1], [0], [0], [1], [0, 0, 1, 1], [], []>} : vector<8x17xf32>, vector<17x128xf32>, vector<8x128xf32> -> vector<8x128xf32>
    %104 = arith.addf %99, %103 : vector<8x128xf32>
    %cst_45 = arith.constant 0.000000e+00 : f32
    %105 = vector.broadcast %cst_45 : f32 to vector<8x128xf32>
    %106 = arith.maximumf %104, %105 : vector<8x128xf32>
    %c0_46 = arith.constant 0 : index
    %c0_47 = arith.constant 0 : index
    %c0_48 = arith.constant 0 : index
    %107 = vector.load %arg10[%c0_46, %c0_47, %c0_48] : memref<1x8x128xf32, #tpu.memory_space<vmem>>, vector<1x8x128xf32>
    %108 = vector.shape_cast %107 : vector<1x8x128xf32> to vector<8x128xf32>
    %109 = vector.shape_cast %106 : vector<8x128xf32> to vector<1x8x128xf32>
    tpu.vector_store %arg10[%c0_46, %c0_47, %c0_48], %109 {strides = array<i32>} : memref<1x8x128xf32, #tpu.memory_space<vmem>>, vector<1x8x128xf32>,
    return
  }
  func.func @transform_0(%arg0: i32) -> (i32, i32, i32) {
    %c0_i32 = arith.constant 0 : i32
    %c0_i32_0 = arith.constant 0 : i32
    %c0_i32_1 = arith.constant 0 : i32
    return %arg0, %c0_i32, %c0_i32_0 : i32, i32, i32
  }
  func.func @transform_1(%arg0: i32) -> (i32, i32) {
    %c0_i32 = arith.constant 0 : i32
    %c0_i32_0 = arith.constant 0 : i32
    %c0_i32_1 = arith.constant 0 : i32
    return %c0_i32, %c0_i32_0 : i32, i32
  }
  func.func @transform_2(%arg0: i32) -> (i32, i32) {
    %c0_i32 = arith.constant 0 : i32
    %c0_i32_0 = arith.constant 0 : i32
    %c0_i32_1 = arith.constant 0 : i32
    return %c0_i32, %c0_i32_0 : i32, i32
  }
  func.func @transform_3(%arg0: i32) -> (i32, i32) {
    %c0_i32 = arith.constant 0 : i32
    %c0_i32_0 = arith.constant 0 : i32
    %c0_i32_1 = arith.constant 0 : i32
    return %c0_i32, %c0_i32_0 : i32, i32
  }
  func.func @transform_4(%arg0: i32) -> (i32, i32) {
    %c0_i32 = arith.constant 0 : i32
    %c0_i32_0 = arith.constant 0 : i32
    %c0_i32_1 = arith.constant 0 : i32
    return %c0_i32, %c0_i32_0 : i32, i32
  }
  func.func @transform_5(%arg0: i32) -> (i32, i32) {
    %c0_i32 = arith.constant 0 : i32
    %c0_i32_0 = arith.constant 0 : i32
    %c0_i32_1 = arith.constant 0 : i32
    return %c0_i32, %c0_i32_0 : i32, i32
  }
  func.func @transform_6(%arg0: i32) -> (i32, i32) {
    %c0_i32 = arith.constant 0 : i32
    %c0_i32_0 = arith.constant 0 : i32
    %c0_i32_1 = arith.constant 0 : i32
    return %c0_i32, %c0_i32_0 : i32, i32
  }
  func.func @transform_7(%arg0: i32) -> (i32, i32) {
    %c0_i32 = arith.constant 0 : i32
    %c0_i32_0 = arith.constant 0 : i32
    %c0_i32_1 = arith.constant 0 : i32
    return %c0_i32, %c0_i32_0 : i32, i32
  }
  func.func @transform_8(%arg0: i32) -> (i32, i32) {
    %c0_i32 = arith.constant 0 : i32
    %c0_i32_0 = arith.constant 0 : i32
    %c0_i32_1 = arith.constant 0 : i32
    return %c0_i32, %c0_i32_0 : i32, i32
  }
  func.func @transform_9(%arg0: i32) -> (i32, i32, i32) {
    %c0_i32 = arith.constant 0 : i32
    %c0_i32_0 = arith.constant 0 : i32
    %c0_i32_1 = arith.constant 0 : i32
    return %arg0, %c0_i32, %c0_i32_0 : i32, i32, i32
  }
}

</mosaic_0001>

<llo_original>
// kernel: tpu_custom_call.1
$region0: #{tpu_custom_call.1}
  #allocation0 [shape = 'u32[]', space=smem, size = 0x4, offset = 0x4, fixed_abs, tag = 'smem constant byte address 0x4 - core index']
  #allocation1 [shape = 'u32[144,128]{1,0:T(1,128)}', space=vmem, size = 0x12000, scoped, tag = 'internal scratch']
  %s0 = inlined_call_operand.hbm [shape: f32[2,1,128], index: 0, kind: input, shape index: {}]
  %s1 = inlined_call_operand.vmem [shape: f32[16,4], index: 1, kind: input, shape index: {}]
  %s2 = inlined_call_operand.vmem [shape: f32[16,49], index: 2, kind: input, shape index: {}]
  %s3 = inlined_call_operand.vmem [shape: f32[16,2], index: 3, kind: input, shape index: {}]
  %s4 = inlined_call_operand.vmem [shape: f32[16,49], index: 4, kind: input, shape index: {}]
  %s5 = inlined_call_operand.vmem [shape: f32[16,49], index: 5, kind: input, shape index: {}]
  %s6 = inlined_call_operand.vmem [shape: f32[8,49], index: 6, kind: input, shape index: {}]
  %s7 = inlined_call_operand.vmem [shape: f32[8,25], index: 7, kind: input, shape index: {}]
  %s8 = inlined_call_operand.hbm [shape: f32[8,17], index: 8, kind: input, shape index: {}]
  %s9 = inlined_call_operand.hbm [shape: f32[2,8,128], index: 9, kind: output, shape index: {}]
  %s10 = sld [smem:[#allocation0]]
  $region77: #{tpu_custom_call.1} parent=0
    _
  %s12 = ssub.s32 1, %s10
  %s13 = scalar_select 0, %s12, %s10
  $region1: #{tpu_custom_call.1} parent=0
    #allocation2 [shape = 'u8[1024]{0}', space=vmem, size = 0x400, scoped, tag = 'input window, operand 0']
    #allocation3 [shape = 's32[2]{0}', space=sflag, size = 0x8, scoped, tag = 'scoped memory for tpu_custom_call.1']
    #allocation4 [shape = 's32[2]{0}', space=sflag, size = 0x8, scoped, tag = 'scoped memory for tpu_custom_call.1']
    #allocation5 [shape = 'u8[4096]{0}', space=vmem, size = 0x1000, scoped, tag = 'input window, operand 8, single buffered']
    #allocation6 [shape = 's32[1]{0}', space=sflag, size = 0x4, scoped, tag = 'scoped memory for tpu_custom_call.1']
    #allocation7 [shape = 'u8[8192]{0}', space=vmem, size = 0x2000, scoped, tag = 'output window, operand 0']
    %14 = vsyncpa [#allocation3], 0
    %s15 = scalar_lea.sflag [#allocation3], 1
    %16 = vsyncpa %s15, 0
    %17 = vsyncpa [#allocation6], 0
    %18 = vsyncpa [#allocation4], 0
    %s19 = scalar_lea.sflag [#allocation4], 1
    %20 = vsyncpa %s19, 0
    loop: start=0, step=1, limit=4
    $region2: #{tpu_custom_call.1} parent=1 // loop_pre_header
      _
    $region3: #{tpu_custom_call.1} parent=1 // loop_header
      %s22 = sphi 0, %s26
      %p23 = scmp.ge.s32.totalorder %s22, 4
      %s32 = sphi 0, %s34
      %s35 = sphi 0, %s32
      %s36 = sphi 0, %s35
      %s52 = sphi 0, %s36
      %s56 = sphi 0, %s56
      %s58 = sphi 0, %s56
      %s59 = sphi 0, %s58
      %s73 = sphi 0, %s59
      %s77 = sphi 0, %s77
      %s79 = sphi 0, %s77
      %s80 = sphi 0, %s79
      %s94 = sphi 0, %s80
      %s98 = sphi 0, %s98
      %s100 = sphi 0, %s98
      %s101 = sphi 0, %s100
      %s115 = sphi 0, %s101
      %s119 = sphi 0, %s119
      %s121 = sphi 0, %s119
      %s122 = sphi 0, %s121
      %s136 = sphi 0, %s122
      %s140 = sphi 0, %s140
      %s142 = sphi 0, %s140
      %s143 = sphi 0, %s142
      %s157 = sphi 0, %s143
      %s161 = sphi 0, %s161
      %s163 = sphi 0, %s161
      %s164 = sphi 0, %s163
      %s178 = sphi 0, %s164
      %s182 = sphi 0, %s182
      %s184 = sphi 0, %s182
      %s185 = sphi 0, %s184
      %s199 = sphi 0, %s185
      %s203 = sphi 0, %s203
      %s205 = sphi 0, %s203
      %s206 = sphi 0, %s205
      %s220 = sphi 0, %s206
      %s226 = sphi 0, %s228
      %s229 = sphi 0, %s226
      %s230 = sphi 0, %s229
      %s246 = sphi 0, %s230
    $region4: #{tpu_custom_call.1} parent=1 // loop_header_branch
      %25 = sbr.rel (%p23) target = $region8
    $region5: #{tpu_custom_call.1} parent=1 // loop_body
      %s27 = ssub.s32 %s22, 1
      %s28 = ssub.s32 %s22, 2
      %s29 = sadd.s32 %s22, 1
      %s30 = ssub.s32 %s22, %s29
      %p31 = scmp.eq.s32.totalorder %s30, 0
      %s33 = sadd.s32 %s32, 1
      %s34 = scalar_select %p31, %s32, %s33
      %p37 = pneg %p31
      %p38 = scmp.eq.s32.totalorder %s22, 1
      %p39 = por %p37, %p38
      %p40 = scmp.ne.s32.totalorder %s32, %s35
      %p41 = scmp.eq.s32.totalorder %s22, 0
      %p42 = por %p40, %p41
      %p43 = scmp.ne.s32.totalorder %s32, %s35
      %p44 = scmp.eq.s32.totalorder %s27, 1
      %p45 = por %p43, %p44
      %p46 = scmp.ne.s32.totalorder %s35, %s36
      %p47 = scmp.eq.s32.totalorder %s27, 0
      %p48 = por %p46, %p47
      %p49 = scmp.ne.s32.totalorder %s35, %s36
      %p50 = scmp.eq.s32.totalorder %s28, 1
      %p51 = por %p49, %p50
      %p53 = scmp.ne.s32.totalorder %s36, %s52
      %p54 = scmp.eq.s32.totalorder %s28, 0
      %p55 = por %p53, %p54
      %s57 = sadd.s32 %s56, 1
      %p60 = scmp.eq.s32.totalorder %s22, 1
      %p61 = scmp.ne.s32.totalorder %s56, %s58
      %p62 = scmp.eq.s32.totalorder %s22, 0
      %p63 = por %p61, %p62
      %p64 = scmp.ne.s32.totalorder %s56, %s58
      %p65 = scmp.eq.s32.totalorder %s27, 1
      %p66 = por %p64, %p65
      %p67 = scmp.ne.s32.totalorder %s58, %s59
      %p68 = scmp.eq.s32.totalorder %s27, 0
      %p69 = por %p67, %p68
      %p70 = scmp.ne.s32.totalorder %s58, %s59
      %p71 = scmp.eq.s32.totalorder %s28, 1
      %p72 = por %p70, %p71
      %p74 = scmp.ne.s32.totalorder %s59, %s73
      %p75 = scmp.eq.s32.totalorder %s28, 0
      %p76 = por %p74, %p75
      %s78 = sadd.s32 %s77, 1
      %p81 = scmp.eq.s32.totalorder %s22, 1
      %p82 = scmp.ne.s32.totalorder %s77, %s79
      %p83 = scmp.eq.s32.totalorder %s22, 0
      %p84 = por %p82, %p83
      %p85 = scmp.ne.s32.totalorder %s77, %s79
      %p86 = scmp.eq.s32.totalorder %s27, 1
      %p87 = por %p85, %p86
      %p88 = scmp.ne.s32.totalorder %s79, %s80
      %p89 = scmp.eq.s32.totalorder %s27, 0
      %p90 = por %p88, %p89
      %p91 = scmp.ne.s32.totalorder %s79, %s80
      %p92 = scmp.eq.s32.totalorder %s28, 1
      %p93 = por %p91, %p92
      %p95 = scmp.ne.s32.totalorder %s80, %s94
      %p96 = scmp.eq.s32.totalorder %s28, 0
      %p97 = por %p95, %p96
      %s99 = sadd.s32 %s98, 1
      %p102 = scmp.eq.s32.totalorder %s22, 1
      %p103 = scmp.ne.s32.totalorder %s98, %s100
      %p104 = scmp.eq.s32.totalorder %s22, 0
      %p105 = por %p103, %p104
      %p106 = scmp.ne.s32.totalorder %s98, %s100
      %p107 = scmp.eq.s32.totalorder %s27, 1
      %p108 = por %p106, %p107
      %p109 = scmp.ne.s32.totalorder %s100, %s101
      %p110 = scmp.eq.s32.totalorder %s27, 0
      %p111 = por %p109, %p110
      %p112 = scmp.ne.s32.totalorder %s100, %s101
      %p113 = scmp.eq.s32.totalorder %s28, 1
      %p114 = por %p112, %p113
      %p116 = scmp.ne.s32.totalorder %s101, %s115
      %p117 = scmp.eq.s32.totalorder %s28, 0
      %p118 = por %p116, %p117
      %s120 = sadd.s32 %s119, 1
      %p123 = scmp.eq.s32.totalorder %s22, 1
      %p124 = scmp.ne.s32.totalorder %s119, %s121
      %p125 = scmp.eq.s32.totalorder %s22, 0
      %p126 = por %p124, %p125
      %p127 = scmp.ne.s32.totalorder %s119, %s121
      %p128 = scmp.eq.s32.totalorder %s27, 1
      %p129 = por %p127, %p128
      %p130 = scmp.ne.s32.totalorder %s121, %s122
      %p131 = scmp.eq.s32.totalorder %s27, 0
      %p132 = por %p130, %p131
      %p133 = scmp.ne.s32.totalorder %s121, %s122
      %p134 = scmp.eq.s32.totalorder %s28, 1
      %p135 = por %p133, %p134
      %p137 = scmp.ne.s32.totalorder %s122, %s136
      %p138 = scmp.eq.s32.totalorder %s28, 0
      %p139 = por %p137, %p138
      %s141 = sadd.s32 %s140, 1
      %p144 = scmp.eq.s32.totalorder %s22, 1
      %p145 = scmp.ne.s32.totalorder %s140, %s142
      %p146 = scmp.eq.s32.totalorder %s22, 0
      %p147 = por %p145, %p146
      %p148 = scmp.ne.s32.totalorder %s140, %s142
      %p149 = scmp.eq.s32.totalorder %s27, 1
      %p150 = por %p148, %p149
      %p151 = scmp.ne.s32.totalorder %s142, %s143
      %p152 = scmp.eq.s32.totalorder %s27, 0
      %p153 = por %p151, %p152
      %p154 = scmp.ne.s32.totalorder %s142, %s143
      %p155 = scmp.eq.s32.totalorder %s28, 1
      %p156 = por %p154, %p155
      %p158 = scmp.ne.s32.totalorder %s143, %s157
      %p159 = scmp.eq.s32.totalorder %s28, 0
      %p160 = por %p158, %p159
      %s162 = sadd.s32 %s161, 1
      %p165 = scmp.eq.s32.totalorder %s22, 1
      %p166 = scmp.ne.s32.totalorder %s161, %s163
      %p167 = scmp.eq.s32.totalorder %s22, 0
      %p168 = por %p166, %p167
      %p169 = scmp.ne.s32.totalorder %s161, %s163
      %p170 = scmp.eq.s32.totalorder %s27, 1
      %p171 = por %p169, %p170
      %p172 = scmp.ne.s32.totalorder %s163, %s164
      %p173 = scmp.eq.s32.totalorder %s27, 0
      %p174 = por %p172, %p173
      %p175 = scmp.ne.s32.totalorder %s163, %s164
      %p176 = scmp.eq.s32.totalorder %s28, 1
      %p177 = por %p175, %p176
      %p179 = scmp.ne.s32.totalorder %s164, %s178
      %p180 = scmp.eq.s32.totalorder %s28, 0
      %p181 = por %p179, %p180
      %s183 = sadd.s32 %s182, 1
      %p186 = scmp.eq.s32.totalorder %s22, 1
      %p187 = scmp.ne.s32.totalorder %s182, %s184
      %p188 = scmp.eq.s32.totalorder %s22, 0
      %p189 = por %p187, %p188
      %p190 = scmp.ne.s32.totalorder %s182, %s184
      %p191 = scmp.eq.s32.totalorder %s27, 1
      %p192 = por %p190, %p191
      %p193 = scmp.ne.s32.totalorder %s184, %s185
      %p194 = scmp.eq.s32.totalorder %s27, 0
      %p195 = por %p193, %p194
      %p196 = scmp.ne.s32.totalorder %s184, %s185
      %p197 = scmp.eq.s32.totalorder %s28, 1
      %p198 = por %p196, %p197
      %p200 = scmp.ne.s32.totalorder %s185, %s199
      %p201 = scmp.eq.s32.totalorder %s28, 0
      %p202 = por %p200, %p201
      %s204 = sadd.s32 %s203, 1
      %p207 = scmp.eq.s32.totalorder %s22, 1
      %p208 = scmp.ne.s32.totalorder %s203, %s205
      %p209 = scmp.eq.s32.totalorder %s22, 0
      %p210 = por %p208, %p209
      %p211 = scmp.ne.s32.totalorder %s203, %s205
      %p212 = scmp.eq.s32.totalorder %s27, 1
      %p213 = por %p211, %p212
      %p214 = scmp.ne.s32.totalorder %s205, %s206
      %p215 = scmp.eq.s32.totalorder %s27, 0
      %p216 = por %p214, %p215
      %p217 = scmp.ne.s32.totalorder %s205, %s206
      %p218 = scmp.eq.s32.totalorder %s28, 1
      %p219 = por %p217, %p218
      %p221 = scmp.ne.s32.totalorder %s206, %s220
      %p222 = scmp.eq.s32.totalorder %s28, 0
      %p223 = por %p221, %p222
      %s224 = ssub.s32 %s22, %s29
      %p225 = scmp.eq.s32.totalorder %s224, 0
      %s227 = sadd.s32 %s226, 1
      %s228 = scalar_select %p225, %s226, %s227
      %p231 = pneg %p225
      %p232 = scmp.eq.s32.totalorder %s22, 1
      %p233 = por %p231, %p232
      %p234 = scmp.ne.s32.totalorder %s226, %s229
      %p235 = scmp.eq.s32.totalorder %s22, 0
      %p236 = por %p234, %p235
      %p237 = scmp.ne.s32.totalorder %s226, %s229
      %p238 = scmp.eq.s32.totalorder %s27, 1
      %p239 = por %p237, %p238
      %p240 = scmp.ne.s32.totalorder %s229, %s230
      %p241 = scmp.eq.s32.totalorder %s27, 0
      %p242 = por %p240, %p241
      %p243 = scmp.ne.s32.totalorder %s229, %s230
      %p244 = scmp.eq.s32.totalorder %s28, 1
      %p245 = por %p243, %p244
      %p247 = scmp.ne.s32.totalorder %s230, %s246
      %p248 = scmp.eq.s32.totalorder %s28, 0
      %p249 = por %p247, %p248
      %p250 = scmp.le.s32.totalorder 1, %s22
      %p251 = scmp.lt.s32.totalorder %s22, 3
      %p252 = pnand %p250, %p251
      %p253 = pneg %p252
      // Predicated region
      $region9: #{tpu_custom_call.1} parent=5 // pred_check
        _
      $region10: #{tpu_custom_call.1} parent=5 // pred_check_branch
        %255 = sbr.rel (%p252) target = $region12
      $region11: #{tpu_custom_call.1} parent=5 // pred_region
        %s256 = ssub.s32 %s22, 1
        // Predicated region
        $region13: #{tpu_custom_call.1} parent=11 // pred_check
          %p257 = pneg %p69
        $region14: #{tpu_custom_call.1} parent=11 // pred_check_branch
          %259 = sbr.rel (%p257) target = $region16
        $region15: #{tpu_custom_call.1} parent=11 // pred_region
          _
        $region16: #{tpu_custom_call.1} parent=11 // pred_fallthru
          _
        // Predicated region
        $region17: #{tpu_custom_call.1} parent=11 // pred_check
          %p260 = pneg %p90
        $region18: #{tpu_custom_call.1} parent=11 // pred_check_branch
          %262 = sbr.rel (%p260) target = $region20
        $region19: #{tpu_custom_call.1} parent=11 // pred_region
          _
        $region20: #{tpu_custom_call.1} parent=11 // pred_fallthru
          _
        // Predicated region
        $region21: #{tpu_custom_call.1} parent=11 // pred_check
          %p263 = pneg %p111
        $region22: #{tpu_custom_call.1} parent=11 // pred_check_branch
          %265 = sbr.rel (%p263) target = $region24
        $region23: #{tpu_custom_call.1} parent=11 // pred_region
          _
        $region24: #{tpu_custom_call.1} parent=11 // pred_fallthru
          _
        // Predicated region
        $region25: #{tpu_custom_call.1} parent=11 // pred_check
          %p266 = pneg %p132
        $region26: #{tpu_custom_call.1} parent=11 // pred_check_branch
          %268 = sbr.rel (%p266) target = $region28
        $region27: #{tpu_custom_call.1} parent=11 // pred_region
          _
        $region28: #{tpu_custom_call.1} parent=11 // pred_fallthru
          _
        // Predicated region
        $region29: #{tpu_custom_call.1} parent=11 // pred_check
          %p269 = pneg %p153
        $region30: #{tpu_custom_call.1} parent=11 // pred_check_branch
          %271 = sbr.rel (%p269) target = $region32
        $region31: #{tpu_custom_call.1} parent=11 // pred_region
          _
        $region32: #{tpu_custom_call.1} parent=11 // pred_fallthru
          _
        // Predicated region
        $region33: #{tpu_custom_call.1} parent=11 // pred_check
          %p272 = pneg %p174
        $region34: #{tpu_custom_call.1} parent=11 // pred_check_branch
          %274 = sbr.rel (%p272) target = $region36
        $region35: #{tpu_custom_call.1} parent=11 // pred_region
          _
        $region36: #{tpu_custom_call.1} parent=11 // pred_fallthru
          _
        // Predicated region
        $region37: #{tpu_custom_call.1} parent=11 // pred_check
          %p275 = pneg %p195
        $region38: #{tpu_custom_call.1} parent=11 // pred_check_branch
          %277 = sbr.rel (%p275) target = $region40
        $region39: #{tpu_custom_call.1} parent=11 // pred_region
          _
        $region40: #{tpu_custom_call.1} parent=11 // pred_fallthru
          _
        // Predicated region
        $region41: #{tpu_custom_call.1} parent=11 // pred_check
          %p278 = pneg %p216
        $region42: #{tpu_custom_call.1} parent=11 // pred_check_branch
          %280 = sbr.rel (%p278) target = $region44
        $region43: #{tpu_custom_call.1} parent=11 // pred_region
          %s282 = ssub.s32 128, 128
          %283 = vsyncadd [#allocation6], %s282
          %s285 = sshll.u32 [#allocation5], 4
          %s286 = int_to_ptr.vmem [resolvable:$true] %s285
          %288 = dma.hbm_to_vmem [thread:$0]  %s8, 128, %s286, [#allocation6]
        $region44: #{tpu_custom_call.1} parent=11 // pred_fallthru
          _
      $region12: #{tpu_custom_call.1} parent=5 // pred_fallthru
        _
      %p289 = scmp.lt.s32.totalorder %s22, 2
      // Predicated region
      $region45: #{tpu_custom_call.1} parent=5 // pred_check
        %p290 = pneg %p289
      $region46: #{tpu_custom_call.1} parent=5 // pred_check_branch
        %292 = sbr.rel (%p290) target = $region48
      $region47: #{tpu_custom_call.1} parent=5 // pred_region
        // Predicated region
        $region49: #{tpu_custom_call.1} parent=47 // pred_check
          %p293 = pneg %p42
        $region50: #{tpu_custom_call.1} parent=47 // pred_check_branch
          %295 = sbr.rel (%p293) target = $region52
        $region51: #{tpu_custom_call.1} parent=47 // pred_region
          %s296 = sand.u32 %s32, 1
          %s297 = scalar_lea.sflag [#allocation3], %s296
          %s298 = sand.u32 %s32, 1
          %s299 = scalar_lea.vmem [#allocation2], %s298
          %s301 = ssub.s32 16, 16
          %302 = vsyncadd %s297, %s301
          %s303 = smul.addr %s22, 16
          %s304 = scalar_lea.hbm %s0, %s303
          %s306 = sshll.u32 %s299, 4
          %s307 = int_to_ptr.vmem [resolvable:$true] %s306
          %309 = dma.hbm_to_vmem [thread:$0]  %s304, 16, %s307, %s297
        $region52: #{tpu_custom_call.1} parent=47 // pred_fallthru
          _
      $region48: #{tpu_custom_call.1} parent=5 // pred_fallthru
        _
      %p310 = scmp.le.s32.totalorder 1, %s22
      %p311 = scmp.lt.s32.totalorder %s22, 3
      %p312 = pnand %p310, %p311
      %p313 = pneg %p312
      // Predicated region
      $region53: #{tpu_custom_call.1} parent=5 // pred_check
        _
      $region54: #{tpu_custom_call.1} parent=5 // pred_check_branch
        %315 = sbr.rel (%p312) target = $region56
      $region55: #{tpu_custom_call.1} parent=5 // pred_region
        %s316 = ssub.s32 %s22, 1
        %s317 = sand.u32 %s35, 1
        %s318 = scalar_lea.sflag [#allocation3], %s317
        %s319 = sand.u32 %s35, 1
        %s320 = scalar_lea.vmem [#allocation2], %s319
        // Predicated region
        $region57: #{tpu_custom_call.1} parent=55 // pred_check
          %p321 = pneg %p48
        $region58: #{tpu_custom_call.1} parent=55 // pred_check_branch
          %323 = sbr.rel (%p321) target = $region60
        $region59: #{tpu_custom_call.1} parent=55 // pred_region
          %324 = dma.done %s318, 16
        $region60: #{tpu_custom_call.1} parent=55 // pred_fallthru
          _
        // Predicated region
        $region61: #{tpu_custom_call.1} parent=55 // pred_check
          %p325 = pneg %p216
        $region62: #{tpu_custom_call.1} parent=55 // pred_check_branch
          %327 = sbr.rel (%p325) target = $region64
        $region63: #{tpu_custom_call.1} parent=55 // pred_region
          %328 = dma.done [#allocation6], 128
        $region64: #{tpu_custom_call.1} parent=55 // pred_fallthru
          _
        %s329 = sand.u32 %s35, 1
        %s330 = scalar_lea.sflag [#allocation3], %s329
        %s331 = sand.u32 %s35, 1
        %s332 = scalar_lea.vmem [#allocation2], %s331
        %p333 = pneg %p48
        %p334 = pneg %p45
        %p335 = pneg %p69
        %p336 = pneg %p66
        %p337 = pneg %p90
        %p338 = pneg %p87
        %p339 = pneg %p111
        %p340 = pneg %p108
        %p341 = pneg %p132
        %p342 = pneg %p129
        %p343 = pneg %p153
        %p344 = pneg %p150
        %p345 = pneg %p174
        %p346 = pneg %p171
        %p347 = pneg %p195
        %p348 = pneg %p192
        %p349 = pneg %p216
        %p350 = pneg %p213
        %p351 = pneg %p242
        %p352 = pneg %p239
        %s353 = sand.u32 %s229, 1
        %s354 = scalar_lea.sflag [#allocation4], %s353
        %s355 = sand.u32 %s229, 1
        %s356 = smul.addr %s355, 8
        %s357 = scalar_lea.vmem [#allocation7], %s356
        %v358 = vld [vmem:[%s320] sm:$0x1]
        %v359 = vld [vmem:[%s1] sm:$0xff]
        %v360 = vld [vmem:[%s1 + $0x8] sm:$0xff]
        %v361 = vld [vmem:[%s2] sm:$0xff]
        %v362 = vld [vmem:[%s2 + $0x8] sm:$0xff]
        %v364 = vlaneseq
        %v365 = vshrl.u32 %v364, 7
        %v366 = vsub.s32 0, %v365
        %v367 = vrot.slane %v358, %v366
        %368 = vrot.lane.b32.xlu0 %v367, 2
        %v369 = vpop.permute.xlu0 %368
        %vm371 = vcmask 15360
        %v372 = vsel %vm371, 0.0, %v369
        %374 = vset.pattern.permute.xlu0 0
        %375 = vperm.xlu0 %374, %v359
        %v376 = vpop.permute.xlu0 %375
        %379 = vset.pattern.permute.xlu0 0
        %380 = vperm.xlu0 %379, %v360
        %v381 = vpop.permute.xlu0 %380
        %v383 = vlaneseq
        %v384 = vshrl.u32 %v383, 7
        %v385 = vsub.s32 0, %v384
        %v386 = vrot.slane %v372, %v385
        %v387 = vmul.f32 %v376, %v386
        %v388 = vmul.f32 %v381, %v386
        %v389 = vadd.f32 %v387, 0.0
        %v390 = vadd.f32 %v388, 0.0
        %391 = vset.pattern.permute.xlu0 1
        %392 = vperm.xlu0 %391, %v359
        %v393 = vpop.permute.xlu0 %392
        %395 = vset.pattern.permute.xlu0 1
        %396 = vperm.xlu0 %395, %v360
        %v397 = vpop.permute.xlu0 %396
        %v399 = vlaneseq
        %v400 = vshrl.u32 %v399, 7
        %v401 = vsub.s32 0, %v400
        %v402 = vrot.slane %v369, %v401
        %v403 = vmul.f32 %v393, %v386
        %v404 = vmul.f32 %v393, %v402
        %v405 = vmul.f32 %v397, %v386
        %v406 = vmul.f32 %v397, %v402
        %411 = vrot.lane.b32.xlu0 %v403, 127
        %v412 = vpop.permute.xlu0 %411
        %413 = vrot.lane.b32.xlu0 %v404, 127
        %v414 = vpop.permute.xlu0 %413
        %415 = vrot.lane.b32.xlu0 %v405, 127
        %v416 = vpop.permute.xlu0 %415
        %417 = vrot.lane.b32.xlu0 %v406, 127
        %v418 = vpop.permute.xlu0 %417
        %vm419 = vcmask 1039360
        %v420 = vsel %vm419, %v412, %v414
        %v421 = vsel %vm419, %v416, %v418
        %v424 = vadd.f32 %v389, %v420
        %v425 = vadd.f32 %v390, %v421
        %426 = vset.pattern.permute.xlu0 2
        %427 = vperm.xlu0 %426, %v359
        %v428 = vpop.permute.xlu0 %427
        %430 = vset.pattern.permute.xlu0 2
        %431 = vperm.xlu0 %430, %v360
        %v432 = vpop.permute.xlu0 %431
        %v434 = vmul.f32 %v428, %v386
        %v435 = vmul.f32 %v428, %v402
        %v436 = vmul.f32 %v432, %v386
        %v437 = vmul.f32 %v432, %v402
        %442 = vrot.lane.b32.xlu0 %v434, 126
        %v443 = vpop.permute.xlu0 %442
        %444 = vrot.lane.b32.xlu0 %v435, 126
        %v445 = vpop.permute.xlu0 %444
        %446 = vrot.lane.b32.xlu0 %v436, 126
        %v447 = vpop.permute.xlu0 %446
        %448 = vrot.lane.b32.xlu0 %v437, 126
        %v449 = vpop.permute.xlu0 %448
        %vm450 = vcmask 1031168
        %v451 = vsel %vm450, %v443, %v445
        %v452 = vsel %vm450, %v447, %v449
        %v455 = vadd.f32 %v424, %v451
        %v456 = vadd.f32 %v425, %v452
        %457 = vset.pattern.permute.xlu0 3
        %458 = vperm.xlu0 %457, %v359
        %v459 = vpop.permute.xlu0 %458
        %461 = vset.pattern.permute.xlu0 3
        %462 = vperm.xlu0 %461, %v360
        %v463 = vpop.permute.xlu0 %462
        %v465 = vadd.f32 %v455, %v459
        %v466 = vadd.f32 %v456, %v463
        %v467 = vmax.f32 %v465, 0.0
        %v468 = vmax.f32 %v466, 0.0
        %471 = vrot.lane.b32.xlu0 %v467, 2
        %v472 = vpop.permute.xlu0 %471
        %473 = vrot.lane.b32.xlu0 %v468, 2
        %v474 = vpop.permute.xlu0 %473
        %v477 = vsel %vm371, 0.0, %v472
        %v478 = vsel %vm371, 0.0, %v474
        %481 = vrot.lane.b32.xlu0 %v477, 127
        %v482 = vpop.permute.xlu0 %481
        %483 = vrot.lane.b32.xlu0 %v472, 127
        %v484 = vpop.permute.xlu0 %483
        %485 = vrot.lane.b32.xlu0 %v478, 127
        %v486 = vpop.permute.xlu0 %485
        %487 = vrot.lane.b32.xlu0 %v474, 127
        %v488 = vpop.permute.xlu0 %487
        %v489 = vsel %vm419, %v482, %v484
        %v490 = vsel %vm419, %v486, %v488
        %493 = vrot.lane.b32.xlu0 %v477, 126
        %v494 = vpop.permute.xlu0 %493
        %495 = vrot.lane.b32.xlu0 %v472, 126
        %v496 = vpop.permute.xlu0 %495
        %497 = vrot.lane.b32.xlu0 %v478, 126
        %v498 = vpop.permute.xlu0 %497
        %499 = vrot.lane.b32.xlu0 %v474, 126
        %v500 = vpop.permute.xlu0 %499
        %v501 = vsel %vm450, %v494, %v496
        %v502 = vsel %vm450, %v498, %v500
        %vm505 = vcmask 400384
        %v507 = vsel %vm505, %v361, 0
        %v510 = vsel %vm505, %v362, 0
        %vm512 = vcmask 1040384
        %v514 = vsel %vm512, 1.0, 0
        %516 = vmatprep.subr.mxu0 0.0
        %517 = vmatpush1.msra.mxu0 %v477
        %518 = vmatprep.subr.mxu0 0.0
        %519 = vmatpush1.msra.mxu0 %v478
        %520 = vmatprep.subr.mxu0 0.0
        %521 = vmatpush1.msra.mxu0 %v489
        %522 = vmatprep.subr.mxu0 0.0
        %523 = vmatpush1.msra.mxu0 %v490
        %524 = vmatprep.subr.mxu0 0.0
        %525 = vmatpush1.msra.mxu0 %v501
        %526 = vmatprep.subr.mxu0 0.0
        %527 = vmatpush1.msra.mxu0 %v502
        %528 = vmatprep.subr.mxu0 0.0
        %529 = vmatpush1.msra.mxu0 %v514
        %530 = vmatprep.subr.mxu0 0.0
        %531 = vmatpush1.msra.mxu0 0.0
        %532 = vmatprep.subr.mxu0 0.0
        %533 = vmatpush1.msra.mxu0 0.0
        %534 = vmatprep.subr.mxu0 0.0
        %535 = vmatpush1.msra.mxu0 0.0
        %536 = vmatprep.subr.mxu0 0.0
        %537 = vmatpush1.msra.mxu0 0.0
        %538 = vmatprep.subr.mxu0 0.0
        %539 = vmatpush1.msra.mxu0 0.0
        %540 = vmatprep.subr.mxu0 0.0
        %541 = vmatpush1.msra.mxu0 0.0
        %542 = vmatprep.subr.mxu0 0.0
        %543 = vmatpush1.msra.mxu0 0.0
        %544 = vmatprep.subr.mxu0 0.0
        %545 = vmatpush1.msra.mxu0 0.0
        %546 = vmatprep.subr.mxu0 0.0
        %547 = vmatpush1.msra.mxu0 0.0
        %548 = vmatprep.subr.mxu0 0.0
        %549 = vmatpush1.msra.mxu0 0.0
        %550 = vmatprep.subr.mxu0 0.0
        %551 = vmatpush1.msra.mxu0 0.0
        %552 = vmatprep.subr.mxu0 0.0
        %553 = vmatpush1.msra.mxu0 0.0
        %554 = vmatprep.subr.mxu0 0.0
        %555 = vmatpush1.msra.mxu0 0.0
        %556 = vmatprep.subr.mxu0 0.0
        %557 = vmatpush1.msra.mxu0 0.0
        %558 = vmatprep.subr.mxu0 0.0
        %559 = vmatpush1.msra.mxu0 0.0
        %560 = vmatprep.subr.mxu0 0.0
        %561 = vmatpush1.msra.mxu0 0.0
        %562 = vmatprep.subr.mxu0 0.0
        %563 = vmatpush1.msra.mxu0 0.0
        %564 = vmatprep.subr.mxu0 0.0
        %565 = vmatpush1.msra.mxu0 0.0
        %566 = vmatprep.subr.mxu0 0.0
        %567 = vmatpush1.msra.mxu0 0.0
        %568 = vmatprep.subr.mxu0 0.0
        %569 = vmatpush1.msra.mxu0 0.0
        %570 = vmatprep.subr.mxu0 0.0
        %571 = vmatpush1.msra.mxu0 0.0
        %572 = vmatprep.subr.mxu0 0.0
        %573 = vmatpush1.msra.mxu0 0.0
        %574 = vmatprep.subr.mxu0 0.0
        %575 = vmatpush1.msra.mxu0 0.0
        %576 = vmatprep.subr.mxu0 0.0
        %577 = vmatpush1.msra.mxu0 0.0
        %578 = vmatprep.subr.mxu0 0.0
        %579 = vmatpush1.msra.mxu0 0.0
        %580 = vmatprep.mubr.f32.mxu0 0.0
        %581 = vmatmul.mubr.f32.gmra.mrb[0].mxu0 %v507
        %v582 = vpop.f32.mrb[0].mxu0
        %v583 = vadd.f32 0.0, %v582
        %v584 = vpop.f32.mrb[0].mxu0
        %585 = vmatprep.mubr.f32.mxu0 0.0
        %586 = vmatmul.mubr.f32.gmra.mrb[0].mxu0 %v510
        %v587 = vpop.f32.mrb[0].mxu0
        %v588 = vadd.f32 0.0, %v587
        %v589 = vpop.f32.mrb[0].mxu0
        %590 = vdwg.mxu0
        %v591 = vmax.f32 %v583, 0.0
        %v592 = vmax.f32 %v588, 0.0
        %v593 = vld [vmem:[%s3] sm:$0xff]
        %v594 = vld [vmem:[%s3 + $0x8] sm:$0xff]
        %596 = vset.pattern.permute.xlu0 0
        %597 = vperm.xlu0 %596, %v593
        %v598 = vpop.permute.xlu0 %597
        %601 = vset.pattern.permute.xlu0 0
        %602 = vperm.xlu0 %601, %v594
        %v603 = vpop.permute.xlu0 %602
        %v606 = vmul.f32 %v598, %v367
        %v607 = vmul.f32 %v603, %v367
        %v608 = vadd.f32 %v606, 0.0
        %v609 = vadd.f32 %v607, 0.0
        %610 = vset.pattern.permute.xlu0 1
        %611 = vperm.xlu0 %610, %v593
        %v612 = vpop.permute.xlu0 %611
        %614 = vset.pattern.permute.xlu0 1
        %615 = vperm.xlu0 %614, %v594
        %v616 = vpop.permute.xlu0 %615
        %v618 = vadd.f32 %v608, %v612
        %v619 = vadd.f32 %v609, %v616
        %v620 = vadd.f32 %v591, %v618
        %v621 = vadd.f32 %v592, %v619
        %v622 = vmax.f32 %v620, 0.0
        %v623 = vmax.f32 %v621, 0.0
        %v624 = vld [vmem:[%s4] sm:$0xff]
        %v625 = vld [vmem:[%s4 + $0x8] sm:$0xff]
        %v626 = vld [vmem:[%s5] sm:$0xff]
        %v627 = vld [vmem:[%s5 + $0x8] sm:$0xff]
        %630 = vrot.lane.b32.xlu0 %v622, 4
        %v631 = vpop.permute.xlu0 %630
        %632 = vrot.lane.b32.xlu0 %v623, 4
        %v633 = vpop.permute.xlu0 %632
        %vm636 = vcmask 31744
        %v637 = vsel %vm636, 0.0, %v631
        %v638 = vsel %vm636, 0.0, %v633
        %641 = vrot.lane.b32.xlu0 %v637, 126
        %v642 = vpop.permute.xlu0 %641
        %643 = vrot.lane.b32.xlu0 %v631, 126
        %v644 = vpop.permute.xlu0 %643
        %645 = vrot.lane.b32.xlu0 %v638, 126
        %v646 = vpop.permute.xlu0 %645
        %647 = vrot.lane.b32.xlu0 %v633, 126
        %v648 = vpop.permute.xlu0 %647
        %v649 = vsel %vm450, %v642, %v644
        %v650 = vsel %vm450, %v646, %v648
        %653 = vrot.lane.b32.xlu0 %v637, 124
        %v654 = vpop.permute.xlu0 %653
        %655 = vrot.lane.b32.xlu0 %v631, 124
        %v656 = vpop.permute.xlu0 %655
        %657 = vrot.lane.b32.xlu0 %v638, 124
        %v658 = vpop.permute.xlu0 %657
        %659 = vrot.lane.b32.xlu0 %v633, 124
        %v660 = vpop.permute.xlu0 %659
        %vm661 = vcmask 1014784
        %v662 = vsel %vm661, %v654, %v656
        %v663 = vsel %vm661, %v658, %v660
        %v667 = vsel %vm505, %v624, 0
        %v670 = vsel %vm505, %v625, 0
        %672 = vmatprep.subr.mxu0 0.0
        %673 = vmatpush1.msra.mxu0 %v637
        %674 = vmatprep.subr.mxu0 0.0
        %675 = vmatpush1.msra.mxu0 %v638
        %676 = vmatprep.subr.mxu0 0.0
        %677 = vmatpush1.msra.mxu0 %v649
        %678 = vmatprep.subr.mxu0 0.0
        %679 = vmatpush1.msra.mxu0 %v650
        %680 = vmatprep.subr.mxu0 0.0
        %681 = vmatpush1.msra.mxu0 %v662
        %682 = vmatprep.subr.mxu0 0.0
        %683 = vmatpush1.msra.mxu0 %v663
        %684 = vmatprep.subr.mxu0 0.0
        %685 = vmatpush1.msra.mxu0 %v514
        %686 = vmatprep.subr.mxu0 0.0
        %687 = vmatpush1.msra.mxu0 0.0
        %688 = vmatprep.subr.mxu0 0.0
        %689 = vmatpush1.msra.mxu0 0.0
        %690 = vmatprep.subr.mxu0 0.0
        %691 = vmatpush1.msra.mxu0 0.0
        %692 = vmatprep.subr.mxu0 0.0
        %693 = vmatpush1.msra.mxu0 0.0
        %694 = vmatprep.subr.mxu0 0.0
        %695 = vmatpush1.msra.mxu0 0.0
        %696 = vmatprep.subr.mxu0 0.0
        %697 = vmatpush1.msra.mxu0 0.0
        %698 = vmatprep.subr.mxu0 0.0
        %699 = vmatpush1.msra.mxu0 0.0
        %700 = vmatprep.subr.mxu0 0.0
        %701 = vmatpush1.msra.mxu0 0.0
        %702 = vmatprep.subr.mxu0 0.0
        %703 = vmatpush1.msra.mxu0 0.0
        %704 = vmatprep.subr.mxu0 0.0
        %705 = vmatpush1.msra.mxu0 0.0
        %706 = vmatprep.subr.mxu0 0.0
        %707 = vmatpush1.msra.mxu0 0.0
        %708 = vmatprep.subr.mxu0 0.0
        %709 = vmatpush1.msra.mxu0 0.0
        %710 = vmatprep.subr.mxu0 0.0
        %711 = vmatpush1.msra.mxu0 0.0
        %712 = vmatprep.subr.mxu0 0.0
        %713 = vmatpush1.msra.mxu0 0.0
        %714 = vmatprep.subr.mxu0 0.0
        %715 = vmatpush1.msra.mxu0 0.0
        %716 = vmatprep.subr.mxu0 0.0
        %717 = vmatpush1.msra.mxu0 0.0
        %718 = vmatprep.subr.mxu0 0.0
        %719 = vmatpush1.msra.mxu0 0.0
        %720 = vmatprep.subr.mxu0 0.0
        %721 = vmatpush1.msra.mxu0 0.0
        %722 = vmatprep.subr.mxu0 0.0
        %723 = vmatpush1.msra.mxu0 0.0
        %724 = vmatprep.subr.mxu0 0.0
        %725 = vmatpush1.msra.mxu0 0.0
        %726 = vmatprep.subr.mxu0 0.0
        %727 = vmatpush1.msra.mxu0 0.0
        %728 = vmatprep.subr.mxu0 0.0
        %729 = vmatpush1.msra.mxu0 0.0
        %730 = vmatprep.subr.mxu0 0.0
        %731 = vmatpush1.msra.mxu0 0.0
        %732 = vmatprep.subr.mxu0 0.0
        %733 = vmatpush1.msra.mxu0 0.0
        %734 = vmatprep.subr.mxu0 0.0
        %735 = vmatpush1.msra.mxu0 0.0
        %736 = vmatprep.mubr.f32.mxu0 0.0
        %737 = vmatmul.mubr.f32.gmra.mrb[0].mxu0 %v667
        %v738 = vpop.f32.mrb[0].mxu0
        %v739 = vadd.f32 0.0, %v738
        %v740 = vpop.f32.mrb[0].mxu0
        %741 = vmatprep.mubr.f32.mxu0 0.0
        %742 = vmatmul.mubr.f32.gmra.mrb[0].mxu0 %v670
        %v743 = vpop.f32.mrb[0].mxu0
        %v744 = vadd.f32 0.0, %v743
        %v745 = vpop.f32.mrb[0].mxu0
        %746 = vdwg.mxu0
        %v747 = vmax.f32 %v739, 0.0
        %v748 = vmax.f32 %v744, 0.0
        %751 = vrot.lane.b32.xlu0 %v747, 4
        %v752 = vpop.permute.xlu0 %751
        %753 = vrot.lane.b32.xlu0 %v748, 4
        %v754 = vpop.permute.xlu0 %753
        %v757 = vsel %vm636, 0.0, %v752
        %v758 = vsel %vm636, 0.0, %v754
        %761 = vrot.lane.b32.xlu0 %v757, 126
        %v762 = vpop.permute.xlu0 %761
        %763 = vrot.lane.b32.xlu0 %v752, 126
        %v764 = vpop.permute.xlu0 %763
        %765 = vrot.lane.b32.xlu0 %v758, 126
        %v766 = vpop.permute.xlu0 %765
        %767 = vrot.lane.b32.xlu0 %v754, 126
        %v768 = vpop.permute.xlu0 %767
        %v769 = vsel %vm450, %v762, %v764
        %v770 = vsel %vm450, %v766, %v768
        %773 = vrot.lane.b32.xlu0 %v757, 124
        %v774 = vpop.permute.xlu0 %773
        %775 = vrot.lane.b32.xlu0 %v752, 124
        %v776 = vpop.permute.xlu0 %775
        %777 = vrot.lane.b32.xlu0 %v758, 124
        %v778 = vpop.permute.xlu0 %777
        %779 = vrot.lane.b32.xlu0 %v754, 124
        %v780 = vpop.permute.xlu0 %779
        %v781 = vsel %vm661, %v774, %v776
        %v782 = vsel %vm661, %v778, %v780
        %v786 = vsel %vm505, %v626, 0
        %v789 = vsel %vm505, %v627, 0
        %791 = vmatprep.subr.mxu0 0.0
        %792 = vmatpush1.msra.mxu0 %v757
        %793 = vmatprep.subr.mxu0 0.0
        %794 = vmatpush1.msra.mxu0 %v758
        %795 = vmatprep.subr.mxu0 0.0
        %796 = vmatpush1.msra.mxu0 %v769
        %797 = vmatprep.subr.mxu0 0.0
        %798 = vmatpush1.msra.mxu0 %v770
        %799 = vmatprep.subr.mxu0 0.0
        %800 = vmatpush1.msra.mxu0 %v781
        %801 = vmatprep.subr.mxu0 0.0
        %802 = vmatpush1.msra.mxu0 %v782
        %803 = vmatprep.subr.mxu0 0.0
        %804 = vmatpush1.msra.mxu0 %v514
        %805 = vmatprep.subr.mxu0 0.0
        %806 = vmatpush1.msra.mxu0 0.0
        %807 = vmatprep.subr.mxu0 0.0
        %808 = vmatpush1.msra.mxu0 0.0
        %809 = vmatprep.subr.mxu0 0.0
        %810 = vmatpush1.msra.mxu0 0.0
        %811 = vmatprep.subr.mxu0 0.0
        %812 = vmatpush1.msra.mxu0 0.0
        %813 = vmatprep.subr.mxu0 0.0
        %814 = vmatpush1.msra.mxu0 0.0
        %815 = vmatprep.subr.mxu0 0.0
        %816 = vmatpush1.msra.mxu0 0.0
        %817 = vmatprep.subr.mxu0 0.0
        %818 = vmatpush1.msra.mxu0 0.0
        %819 = vmatprep.subr.mxu0 0.0
        %820 = vmatpush1.msra.mxu0 0.0
        %821 = vmatprep.subr.mxu0 0.0
        %822 = vmatpush1.msra.mxu0 0.0
        %823 = vmatprep.subr.mxu0 0.0
        %824 = vmatpush1.msra.mxu0 0.0
        %825 = vmatprep.subr.mxu0 0.0
        %826 = vmatpush1.msra.mxu0 0.0
        %827 = vmatprep.subr.mxu0 0.0
        %828 = vmatpush1.msra.mxu0 0.0
        %829 = vmatprep.subr.mxu0 0.0
        %830 = vmatpush1.msra.mxu0 0.0
        %831 = vmatprep.subr.mxu0 0.0
        %832 = vmatpush1.msra.mxu0 0.0
        %833 = vmatprep.subr.mxu0 0.0
        %834 = vmatpush1.msra.mxu0 0.0
        %835 = vmatprep.subr.mxu0 0.0
        %836 = vmatpush1.msra.mxu0 0.0
        %837 = vmatprep.subr.mxu0 0.0
        %838 = vmatpush1.msra.mxu0 0.0
        %839 = vmatprep.subr.mxu0 0.0
        %840 = vmatpush1.msra.mxu0 0.0
        %841 = vmatprep.subr.mxu0 0.0
        %842 = vmatpush1.msra.mxu0 0.0
        %843 = vmatprep.subr.mxu0 0.0
        %844 = vmatpush1.msra.mxu0 0.0
        %845 = vmatprep.subr.mxu0 0.0
        %846 = vmatpush1.msra.mxu0 0.0
        %847 = vmatprep.subr.mxu0 0.0
        %848 = vmatpush1.msra.mxu0 0.0
        %849 = vmatprep.subr.mxu0 0.0
        %850 = vmatpush1.msra.mxu0 0.0
        %851 = vmatprep.subr.mxu0 0.0
        %852 = vmatpush1.msra.mxu0 0.0
        %853 = vmatprep.subr.mxu0 0.0
        %854 = vmatpush1.msra.mxu0 0.0
        %855 = vmatprep.mubr.f32.mxu0 0.0
        %856 = vmatmul.mubr.f32.gmra.mrb[0].mxu0 %v786
        %v857 = vpop.f32.mrb[0].mxu0
        %v858 = vadd.f32 0.0, %v857
        %v859 = vpop.f32.mrb[0].mxu0
        %860 = vmatprep.mubr.f32.mxu0 0.0
        %861 = vmatmul.mubr.f32.gmra.mrb[0].mxu0 %v789
        %v862 = vpop.f32.mrb[0].mxu0
        %v863 = vadd.f32 0.0, %v862
        %v864 = vpop.f32.mrb[0].mxu0
        %865 = vdwg.mxu0
        %v866 = vmax.f32 %v858, 0.0
        %v867 = vmax.f32 %v863, 0.0
        %v868 = vadd.f32 %v866, %v622
        %v869 = vadd.f32 %v867, %v623
        %v870 = vmax.f32 %v868, 0.0
        %v871 = vmax.f32 %v869, 0.0
        %v872 = vld [vmem:[%s6] sm:$0xff]
        %v873 = vld [vmem:[%s7] sm:$0xff]
        %876 = vrot.lane.b32.xlu0 %v870, 8
        %v877 = vpop.permute.xlu0 %876
        %878 = vrot.lane.b32.xlu0 %v871, 8
        %v879 = vpop.permute.xlu0 %878
        %vm882 = vcmask 64512
        %v883 = vsel %vm882, 0.0, %v877
        %v884 = vsel %vm882, 0.0, %v879
        %887 = vrot.lane.b32.xlu0 %v883, 124
        %v888 = vpop.permute.xlu0 %887
        %889 = vrot.lane.b32.xlu0 %v877, 124
        %v890 = vpop.permute.xlu0 %889
        %891 = vrot.lane.b32.xlu0 %v884, 124
        %v892 = vpop.permute.xlu0 %891
        %893 = vrot.lane.b32.xlu0 %v879, 124
        %v894 = vpop.permute.xlu0 %893
        %v895 = vsel %vm661, %v888, %v890
        %v896 = vsel %vm661, %v892, %v894
        %899 = vrot.lane.b32.xlu0 %v883, 120
        %v900 = vpop.permute.xlu0 %899
        %901 = vrot.lane.b32.xlu0 %v877, 120
        %v902 = vpop.permute.xlu0 %901
        %903 = vrot.lane.b32.xlu0 %v884, 120
        %v904 = vpop.permute.xlu0 %903
        %905 = vrot.lane.b32.xlu0 %v879, 120
        %v906 = vpop.permute.xlu0 %905
        %vm907 = vcmask 982016
        %v908 = vsel %vm907, %v900, %v902
        %v909 = vsel %vm907, %v904, %v906
        %v913 = vsel %vm505, %v872, 0
        %915 = vmatprep.subr.mxu0 0.0
        %916 = vmatpush1.msra.mxu0 %v883
        %917 = vmatprep.subr.mxu0 0.0
        %918 = vmatpush1.msra.mxu0 %v884
        %919 = vmatprep.subr.mxu0 0.0
        %920 = vmatpush1.msra.mxu0 %v895
        %921 = vmatprep.subr.mxu0 0.0
        %922 = vmatpush1.msra.mxu0 %v896
        %923 = vmatprep.subr.mxu0 0.0
        %924 = vmatpush1.msra.mxu0 %v908
        %925 = vmatprep.subr.mxu0 0.0
        %926 = vmatpush1.msra.mxu0 %v909
        %927 = vmatprep.subr.mxu0 0.0
        %928 = vmatpush1.msra.mxu0 %v514
        %929 = vmatprep.subr.mxu0 0.0
        %930 = vmatpush1.msra.mxu0 0.0
        %931 = vmatprep.subr.mxu0 0.0
        %932 = vmatpush1.msra.mxu0 0.0
        %933 = vmatprep.subr.mxu0 0.0
        %934 = vmatpush1.msra.mxu0 0.0
        %935 = vmatprep.subr.mxu0 0.0
        %936 = vmatpush1.msra.mxu0 0.0
        %937 = vmatprep.subr.mxu0 0.0
        %938 = vmatpush1.msra.mxu0 0.0
        %939 = vmatprep.subr.mxu0 0.0
        %940 = vmatpush1.msra.mxu0 0.0
        %941 = vmatprep.subr.mxu0 0.0
        %942 = vmatpush1.msra.mxu0 0.0
        %943 = vmatprep.subr.mxu0 0.0
        %944 = vmatpush1.msra.mxu0 0.0
        %945 = vmatprep.subr.mxu0 0.0
        %946 = vmatpush1.msra.mxu0 0.0
        %947 = vmatprep.subr.mxu0 0.0
        %948 = vmatpush1.msra.mxu0 0.0
        %949 = vmatprep.subr.mxu0 0.0
        %950 = vmatpush1.msra.mxu0 0.0
        %951 = vmatprep.subr.mxu0 0.0
        %952 = vmatpush1.msra.mxu0 0.0
        %953 = vmatprep.subr.mxu0 0.0
        %954 = vmatpush1.msra.mxu0 0.0
        %955 = vmatprep.subr.mxu0 0.0
        %956 = vmatpush1.msra.mxu0 0.0
        %957 = vmatprep.subr.mxu0 0.0
        %958 = vmatpush1.msra.mxu0 0.0
        %959 = vmatprep.subr.mxu0 0.0
        %960 = vmatpush1.msra.mxu0 0.0
        %961 = vmatprep.subr.mxu0 0.0
        %962 = vmatpush1.msra.mxu0 0.0
        %963 = vmatprep.subr.mxu0 0.0
        %964 = vmatpush1.msra.mxu0 0.0
        %965 = vmatprep.subr.mxu0 0.0
        %966 = vmatpush1.msra.mxu0 0.0
        %967 = vmatprep.subr.mxu0 0.0
        %968 = vmatpush1.msra.mxu0 0.0
        %969 = vmatprep.subr.mxu0 0.0
        %970 = vmatpush1.msra.mxu0 0.0
        %971 = vmatprep.subr.mxu0 0.0
        %972 = vmatpush1.msra.mxu0 0.0
        %973 = vmatprep.subr.mxu0 0.0
        %974 = vmatpush1.msra.mxu0 0.0
        %975 = vmatprep.subr.mxu0 0.0
        %976 = vmatpush1.msra.mxu0 0.0
        %977 = vmatprep.subr.mxu0 0.0
        %978 = vmatpush1.msra.mxu0 0.0
        %979 = vmatprep.mubr.f32.mxu0 0.0
        %980 = vmatmul.mubr.f32.gmra.mrb[0].mxu0 %v913
        %v981 = vpop.f32.mrb[0].mxu0
        %v982 = vadd.f32 0.0, %v981
        %v983 = vpop.f32.mrb[0].mxu0
        %984 = vdwg.mxu0
        %v985 = vmax.f32 %v982, 0.0
        %987 = vrot.lane.b32.xlu0 %v985, 8
        %v988 = vpop.permute.xlu0 %987
        %v990 = vsel %vm882, 0.0, %v988
        %992 = vrot.lane.b32.xlu0 %v990, 124
        %v993 = vpop.permute.xlu0 %992
        %994 = vrot.lane.b32.xlu0 %v988, 124
        %v995 = vpop.permute.xlu0 %994
        %v996 = vsel %vm661, %v993, %v995
        %998 = vrot.lane.b32.xlu0 %v990, 120
        %v999 = vpop.permute.xlu0 %998
        %1000 = vrot.lane.b32.xlu0 %v988, 120
        %v1001 = vpop.permute.xlu0 %1000
        %v1002 = vsel %vm907, %v999, %v1001
        %vm1004 = vcmask 203776
        %v1006 = vsel %vm1004, %v873, 0
        %1008 = vmatprep.subr.mxu0 0.0
        %1009 = vmatpush1.msra.mxu0 %v990
        %1010 = vmatprep.subr.mxu0 0.0
        %1011 = vmatpush1.msra.mxu0 %v996
        %1012 = vmatprep.subr.mxu0 0.0
        %1013 = vmatpush1.msra.mxu0 %v1002
        %1014 = vmatprep.subr.mxu0 0.0
        %1015 = vmatpush1.msra.mxu0 %v514
        %1016 = vmatprep.subr.mxu0 0.0
        %1017 = vmatpush1.msra.mxu0 0.0
        %1018 = vmatprep.subr.mxu0 0.0
        %1019 = vmatpush1.msra.mxu0 0.0
        %1020 = vmatprep.subr.mxu0 0.0
        %1021 = vmatpush1.msra.mxu0 0.0
        %1022 = vmatprep.subr.mxu0 0.0
        %1023 = vmatpush1.msra.mxu0 0.0
        %1024 = vmatprep.subr.mxu0 0.0
        %1025 = vmatpush1.msra.mxu0 0.0
        %1026 = vmatprep.subr.mxu0 0.0
        %1027 = vmatpush1.msra.mxu0 0.0
        %1028 = vmatprep.subr.mxu0 0.0
        %1029 = vmatpush1.msra.mxu0 0.0
        %1030 = vmatprep.subr.mxu0 0.0
        %1031 = vmatpush1.msra.mxu0 0.0
        %1032 = vmatprep.subr.mxu0 0.0
        %1033 = vmatpush1.msra.mxu0 0.0
        %1034 = vmatprep.subr.mxu0 0.0
        %1035 = vmatpush1.msra.mxu0 0.0
        %1036 = vmatprep.subr.mxu0 0.0
        %1037 = vmatpush1.msra.mxu0 0.0
        %1038 = vmatprep.subr.mxu0 0.0
        %1039 = vmatpush1.msra.mxu0 0.0
        %1040 = vmatprep.subr.mxu0 0.0
        %1041 = vmatpush1.msra.mxu0 0.0
        %1042 = vmatprep.subr.mxu0 0.0
        %1043 = vmatpush1.msra.mxu0 0.0
        %1044 = vmatprep.subr.mxu0 0.0
        %1045 = vmatpush1.msra.mxu0 0.0
        %1046 = vmatprep.subr.mxu0 0.0
        %1047 = vmatpush1.msra.mxu0 0.0
        %1048 = vmatprep.subr.mxu0 0.0
        %1049 = vmatpush1.msra.mxu0 0.0
        %1050 = vmatprep.subr.mxu0 0.0
        %1051 = vmatpush1.msra.mxu0 0.0
        %1052 = vmatprep.subr.mxu0 0.0
        %1053 = vmatpush1.msra.mxu0 0.0
        %1054 = vmatprep.subr.mxu0 0.0
        %1055 = vmatpush1.msra.mxu0 0.0
        %1056 = vmatprep.subr.mxu0 0.0
        %1057 = vmatpush1.msra.mxu0 0.0
        %1058 = vmatprep.subr.mxu0 0.0
        %1059 = vmatpush1.msra.mxu0 0.0
        %1060 = vmatprep.subr.mxu0 0.0
        %1061 = vmatpush1.msra.mxu0 0.0
        %1062 = vmatprep.subr.mxu0 0.0
        %1063 = vmatpush1.msra.mxu0 0.0
        %1064 = vmatprep.subr.mxu0 0.0
        %1065 = vmatpush1.msra.mxu0 0.0
        %1066 = vmatprep.subr.mxu0 0.0
        %1067 = vmatpush1.msra.mxu0 0.0
        %1068 = vmatprep.subr.mxu0 0.0
        %1069 = vmatpush1.msra.mxu0 0.0
        %1070 = vmatprep.subr.mxu0 0.0
        %1071 = vmatpush1.msra.mxu0 0.0
        %1072 = vmatprep.mubr.f32.mxu0 0.0
        %1073 = vmatmul.mubr.f32.gmra.mrb[0].mxu0 %v1006
        %v1074 = vpop.f32.mrb[0].mxu0
        %v1075 = vadd.f32 0.0, %v1074
        %v1076 = vpop.f32.mrb[0].mxu0
        %1077 = vdwg.mxu0
        %v1078 = vmax.f32 %v1075, 0.0
        %v1079 = vld [vmem:[#allocation5] sm:$0xff]
        %vm1080 = vcmask 138240
        %v1082 = vsel %vm1080, %v1079, 0
        %1084 = vmatprep.subr.mxu0 0.0
        %1085 = vmatpush1.msra.mxu0 %v870
        %1086 = vmatprep.subr.mxu0 0.0
        %1087 = vmatpush1.msra.mxu0 %v871
        %1088 = vmatprep.subr.mxu0 0.0
        %1089 = vmatpush1.msra.mxu0 %v514
        %1090 = vmatprep.subr.mxu0 0.0
        %1091 = vmatpush1.msra.mxu0 0.0
        %1092 = vmatprep.subr.mxu0 0.0
        %1093 = vmatpush1.msra.mxu0 0.0
        %1094 = vmatprep.subr.mxu0 0.0
        %1095 = vmatpush1.msra.mxu0 0.0
        %1096 = vmatprep.subr.mxu0 0.0
        %1097 = vmatpush1.msra.mxu0 0.0
        %1098 = vmatprep.subr.mxu0 0.0
        %1099 = vmatpush1.msra.mxu0 0.0
        %1100 = vmatprep.subr.mxu0 0.0
        %1101 = vmatpush1.msra.mxu0 0.0
        %1102 = vmatprep.subr.mxu0 0.0
        %1103 = vmatpush1.msra.mxu0 0.0
        %1104 = vmatprep.subr.mxu0 0.0
        %1105 = vmatpush1.msra.mxu0 0.0
        %1106 = vmatprep.subr.mxu0 0.0
        %1107 = vmatpush1.msra.mxu0 0.0
        %1108 = vmatprep.subr.mxu0 0.0
        %1109 = vmatpush1.msra.mxu0 0.0
        %1110 = vmatprep.subr.mxu0 0.0
        %1111 = vmatpush1.msra.mxu0 0.0
        %1112 = vmatprep.subr.mxu0 0.0
        %1113 = vmatpush1.msra.mxu0 0.0
        %1114 = vmatprep.subr.mxu0 0.0
        %1115 = vmatpush1.msra.mxu0 0.0
        %1116 = vmatprep.subr.mxu0 0.0
        %1117 = vmatpush1.msra.mxu0 0.0
        %1118 = vmatprep.subr.mxu0 0.0
        %1119 = vmatpush1.msra.mxu0 0.0
        %1120 = vmatprep.subr.mxu0 0.0
        %1121 = vmatpush1.msra.mxu0 0.0
        %1122 = vmatprep.subr.mxu0 0.0
        %1123 = vmatpush1.msra.mxu0 0.0
        %1124 = vmatprep.subr.mxu0 0.0
        %1125 = vmatpush1.msra.mxu0 0.0
        %1126 = vmatprep.subr.mxu0 0.0
        %1127 = vmatpush1.msra.mxu0 0.0
        %1128 = vmatprep.subr.mxu0 0.0
        %1129 = vmatpush1.msra.mxu0 0.0
        %1130 = vmatprep.subr.mxu0 0.0
        %1131 = vmatpush1.msra.mxu0 0.0
        %1132 = vmatprep.subr.mxu0 0.0
        %1133 = vmatpush1.msra.mxu0 0.0
        %1134 = vmatprep.subr.mxu0 0.0
        %1135 = vmatpush1.msra.mxu0 0.0
        %1136 = vmatprep.subr.mxu0 0.0
        %1137 = vmatpush1.msra.mxu0 0.0
        %1138 = vmatprep.subr.mxu0 0.0
        %1139 = vmatpush1.msra.mxu0 0.0
        %1140 = vmatprep.subr.mxu0 0.0
        %1141 = vmatpush1.msra.mxu0 0.0
        %1142 = vmatprep.subr.mxu0 0.0
        %1143 = vmatpush1.msra.mxu0 0.0
        %1144 = vmatprep.subr.mxu0 0.0
        %1145 = vmatpush1.msra.mxu0 0.0
        %1146 = vmatprep.subr.mxu0 0.0
        %1147 = vmatpush1.msra.mxu0 0.0
        %1148 = vmatprep.mubr.f32.mxu0 0.0
        %1149 = vmatmul.mubr.f32.gmra.mrb[0].mxu0 %v1082
        %v1150 = vpop.f32.mrb[0].mxu0
        %v1151 = vadd.f32 0.0, %v1150
        %v1152 = vpop.f32.mrb[0].mxu0
        %1153 = vdwg.mxu0
        %v1154 = vadd.f32 %v1078, %v1151
        %v1155 = vmax.f32 %v1154, 0.0
        %1156 = vst [vmem:[%s357] sm:$0xff] %v1155
        %s1157 = sand.u32 %s229, 1
        %s1158 = scalar_lea.sflag [#allocation4], %s1157
        %s1159 = sand.u32 %s229, 1
        %s1160 = smul.addr %s1159, 8
        %s1161 = scalar_lea.vmem [#allocation7], %s1160
        // Predicated region
        $region65: #{tpu_custom_call.1} parent=55 // pred_check
          %p1162 = pneg %p239
        $region66: #{tpu_custom_call.1} parent=55 // pred_check_branch
          %1164 = sbr.rel (%p1162) target = $region68
        $region67: #{tpu_custom_call.1} parent=55 // pred_region
          %s1166 = ssub.s32 128, 128
          %1167 = vsyncadd %s1158, %s1166
          %s1168 = smul.addr %s27, 128
          %s1169 = scalar_lea.hbm %s9, %s1168
          %s1171 = sshll.u32 %s1161, 4
          %s1172 = int_to_ptr.vmem [resolvable:$true] %s1171
          %1174 = dma.vmem_to_hbm [thread:$0]  %s1172, 128, %s1169, %s1158
        $region68: #{tpu_custom_call.1} parent=55 // pred_fallthru
          _
      $region56: #{tpu_custom_call.1} parent=5 // pred_fallthru
        _
      %p1175 = scmp.le.s32.totalorder 2, %s22
      // Predicated region
      $region69: #{tpu_custom_call.1} parent=5 // pred_check
        %p1176 = pneg %p1175
      $region70: #{tpu_custom_call.1} parent=5 // pred_check_branch
        %1178 = sbr.rel (%p1176) target = $region72
      $region71: #{tpu_custom_call.1} parent=5 // pred_region
        %s1179 = ssub.s32 %s22, 2
        // Predicated region
        $region73: #{tpu_custom_call.1} parent=71 // pred_check
          %p1180 = pneg %p245
        $region74: #{tpu_custom_call.1} parent=71 // pred_check_branch
          %1182 = sbr.rel (%p1180) target = $region76
        $region75: #{tpu_custom_call.1} parent=71 // pred_region
          %s1183 = sand.u32 %s230, 1
          %s1184 = scalar_lea.sflag [#allocation4], %s1183
          %s1185 = sand.u32 %s230, 1
          %s1186 = smul.addr %s1185, 8
          %s1187 = scalar_lea.vmem [#allocation7], %s1186
          %1188 = dma.done %s1184, 128
        $region76: #{tpu_custom_call.1} parent=71 // pred_fallthru
          _
      $region72: #{tpu_custom_call.1} parent=5 // pred_fallthru
        _
    $region6: #{tpu_custom_call.1} parent=1 // loop_footer
      %s26 = sadd.s32 1, %s22
    $region7: #{tpu_custom_call.1} parent=1 // loop_footer_branch
      %21 = sbr.rel target = $region3
    $region8: #{tpu_custom_call.1} parent=1 // loop_exit
      _
    %1189 = vsyncpa [#allocation3], 1
    %s1190 = scalar_lea.sflag [#allocation3], 1
    %1191 = vsyncpa %s1190, 1
    %1192 = vsyncpa [#allocation6], 1
    %1193 = vsyncpa [#allocation4], 1
    %s1194 = scalar_lea.sflag [#allocation4], 1
    %1195 = vsyncpa %s1194, 1

</llo_original>
